<compile_context>
chip_gen: v5e
topology: v5e:2x2
jax: 0.10.0
libtpu: 0.0.40
codegen_flags: <defaults>
</compile_context>

<pallas_src>
import functools
import math

import jax
import jax.numpy as jnp
from jax import lax
from jax.experimental import pallas as pl
from jax.experimental.pallas import tpu as pltpu


def _sublane_fold(a, group):
    """Sum (TD, TH, W) down to (TD, group, W) in f32.

    Uses only aligned static sublane slices + elementwise vreg adds: no reshape,
    no cross-sublane (XLU) reduction in the hot loop.
    """
    th = a.shape[1]
    if th % group != 0:
        # Odd full-H tile: keep all rows; finalize reduces them once at the end.
        return a.astype(jnp.float32)
    out = a[:, 0:group, :].astype(jnp.float32)
    for g in range(1, th // group):
        out = out + a[:, g * group:(g + 1) * group, :].astype(jnp.float32)
    return out


def _tv_kernel(x_ref, o_ref, acc_ref, corr_ref, carry_ref):
    hi = pl.program_id(1)
    nh = pl.num_programs(1)

    # Cast in-kernel: 16-bit inputs are DMA'd at native width (half HBM traffic).
    x = x_ref[...].astype(jnp.float32)          # (TD, TH, W)
    th = x.shape[1]

    # --- unmasked finite differences (rolls run on the idle XLU slot) ---------
    # Horizontal: dh[:, :, l] = |x[:,:,l] - x[:,:,l-1]| for l >= 1; column 0 wraps.
    dh = jnp.abs(x - pltpu.roll(x, shift=1, axis=2))
    # Vertical:   dv[:, j, :] = |x[:,j,:] - x[:,j-1,:]| for j >= 1; row 0 wraps.
    dv = jnp.abs(x - pltpu.roll(x, shift=1, axis=1))

    # --- fold TH -> 8 sublanes with pure elementwise f32 adds -----------------
    dh_slab = _sublane_fold(dh, 8)              # (TD, acc_sub, W)
    dv_slab = _sublane_fold(dv, 8)

    # Zero the wrapped lane-0 column of the horizontal partial.  The mask is only
    # (TD, acc_sub, W) -- 1/(TH/8) of the tile -- not a full-tile mask.
    lane = lax.broadcasted_iota(jnp.int32, dh_slab.shape, dimension=2)
    dh_slab = jnp.where(lane >= 1, dh_slab, 0.0)

    # --- (TD, W)-level corrections for the vertical wrap row ------------------
    x0 = x[:, 0, :]                             # first row of this H tile
    x_last = x[:, th - 1, :]                    # last row (halo for next step)
    # dv row 0 added |x0 - x_last| (spurious wrap); subtract the identical value.
    spurious = jnp.abs(x0 - x_last)
    # True cross-tile boundary term: row 0 vs carried last row of previous tile.
    boundary = jnp.where(hi > 0, jnp.abs(x0 - carry_ref[...]), 0.0)
    carry_ref[...] = x_last                     # save halo for the next H step

    @pl.when(hi == 0)
    def _init():
        acc_ref[...] = jnp.zeros_like(acc_ref)
        corr_ref[...] = jnp.zeros_like(corr_ref)

    acc_ref[...] += dh_slab + dv_slab
    corr_ref[...] += boundary - spurious

    @pl.when(hi == nh - 1)
    def _finalize():
        # Single cross-sublane + lane reduce per D tile.
        per_lane = jnp.sum(acc_ref[...], axis=1) + corr_ref[...]        # (TD, W)
        o_ref[...] = jnp.sum(per_lane, axis=-1, keepdims=True).astype(o_ref.dtype)


def _pick_tiles(d, h, w, itemsize, target_bytes):
    """Choose (TD, TH).

    Constraints: output block (td, 1) needs td % 8 == 0 or td == d; input block
    (th, w) needs th % sub == 0 (sub = native sublane multiple for the dtype) or
    th == h; tiles divide the array exactly.  Prefers >= 2 blocks along the
    parallel D axis (keeps both v7x TensorCores busy) and blocks that fit a
    temporaries-aware VMEM budget.
    """
    sub = {4: 8, 2: 16, 1: 32}.get(itemsize, 8)

    # VMEM budget per block: double-buffered input + ~6 f32-sized in-kernel
    # temporaries per element (x, rolled copies, dh, dv), conservatively.
    budget_elems = (40 << 20) // (2 * itemsize + 6 * 4)
    target_elems = min(max(1, target_bytes // itemsize), budget_elems)

    # Legal D tiles; prefer candidates that give >= 2 blocks on the parallel axis.
    td_cands = sorted({t for t in range(8, d + 1, 8) if d % t == 0} | {d})
    two_blk = [t for t in td_cands if t <= d // 2]
    td_pool = two_blk if two_blk else td_cands

    # Legal H tiles; cap at 512 rows to bound the in-kernel fold unrolling.
    th_div = [t for t in range(sub, min(h, 512) + 1, sub) if h % t == 0]
    th_cands = th_div if th_div else [h]

    best = None
    for td in td_pool:
        for th in th_cands:
            e = td * th * w
            fits = e <= target_elems
            key = (fits, e if fits else -e)     # largest fitting, else smallest
            if best is None or key > best[0]:
                best = (key, td, th)
    return best[1], best[2]


def total_variation(x, *, target_block_bytes=4 * 1024 * 1024):
    """Pallas TPU implementation of crip's totalVariation for a (..., H, W) stack."""
    assert x.ndim >= 2, "expects image(s) shaped (..., H, W)"
    batch_shape = x.shape[:-2]
    h, w = x.shape[-2:]
    d = math.prod(batch_shape) if batch_shape else 1
    x3 = x.reshape(d, h, w)

    itemsize = jnp.dtype(x.dtype).itemsize
    td, th = _pick_tiles(d, h, w, itemsize, target_block_bytes)
    grid = (d // td, h // th)
    acc_sub = 8 if th % 8 == 0 else th

    # Explicit scoped-VMEM limit: double-buffered input + f32 temporaries +
    # scratch + margin, clamped to a range that is safe on v5e/v6e (128 MiB
    # physical) and v7x (64 MiB physical), and never below the default ceilings.
    block_elems = td * th * w
    vmem_est = (2 * block_elems * itemsize + 6 * block_elems * 4
                + td * (acc_sub + 2) * w * 4 + (2 << 20))
    vmem_limit = int(min(56 << 20, max(32 << 20, vmem_est)))

    out = pl.pallas_call(
        _tv_kernel,
        out_shape=jax.ShapeDtypeStruct((d, 1), jnp.float32),
        grid_spec=pltpu.PrefetchScalarGridSpec(
            num_scalar_prefetch=0,
            grid=grid,
            in_specs=[pl.BlockSpec((td, th, w), lambda di, hi: (di, hi, 0))],
            out_specs=pl.BlockSpec((td, 1), lambda di, hi: (di, 0)),
            scratch_shapes=[
                pltpu.VMEM((td, acc_sub, w), jnp.float32),  # folded partial sums
                pltpu.VMEM((td, w), jnp.float32),           # wrap/halo corrections
                pltpu.VMEM((td, w), jnp.float32),           # halo: prev tile's last row
            ],
        ),
        compiler_params=pltpu.CompilerParams(
            # D tiles are independent (megacore-shardable); H carries the
            # accumulator + halo, so it is the sequential axis.
            dimension_semantics=("parallel", "arbitrary"),
            vmem_limit_bytes=vmem_limit,
        ),
        cost_estimate=pl.CostEstimate(
            flops=4 * d * h * w,
            transcendentals=0,
            bytes_accessed=d * h * w * itemsize + 4 * d,
        ),
    )(x3)
    return out[:, 0].reshape(batch_shape)


def _tv_reference(x):
    x = x.astype(jnp.float32)
    return (jnp.sum(jnp.abs(x[..., :, 1:] - x[..., :, :-1]), axis=(-2, -1)) +
            jnp.sum(jnp.abs(x[..., 1:, :] - x[..., :-1, :]), axis=(-2, -1)))


if __name__ == "__main__":
    key = jax.random.PRNGKey(0)
    k0, k1, k2, k3, k4 = jax.random.split(key, 5)

    # Module-scale shape: a (batch=2, channels=4) stack of 16x16 images.
    x = jax.random.normal(k0, (2, 4, 16, 16), dtype=jnp.float32)
    tv = jax.block_until_ready(total_variation(x))
    assert tv.shape == (2, 4)
    assert jnp.allclose(tv, _tv_reference(x), rtol=1e-5, atol=1e-4), (tv, _tv_reference(x))

    # Forced small blocks -> exercises H tiling, the accumulator and the halo carry.
    xb = jax.random.normal(k1, (8, 256, 128), dtype=jnp.float32)
    tvb = jax.block_until_ready(total_variation(xb, target_block_bytes=64 * 1024))
    assert jnp.allclose(tvb, _tv_reference(xb), rtol=1e-4, atol=1e-2)

    # Deeper stack -> exercises D tiling (>= 2 blocks on the parallel axis).
    xd = jax.random.normal(k2, (16, 256, 128), dtype=jnp.float32)
    tvd = jax.block_until_ready(total_variation(xd, target_block_bytes=32 * 1024))
    assert jnp.allclose(tvd, _tv_reference(xd), rtol=1e-4, atol=1e-2)

    # bf16 input: loaded natively (half HBM traffic), native (16,128) H tiling,
    # cast to f32 in-kernel.
    xh = xb.astype(jnp.bfloat16)
    tvh = jax.block_until_ready(total_variation(xh, target_block_bytes=64 * 1024))
    assert jnp.allclose(tvh, _tv_reference(xh), rtol=1e-3, atol=1e-1)

    # W not a multiple of 128 + H tiling -> exercises the wrap-column zeroing and
    # halo handling on padded lane layouts.
    xw = jax.random.normal(k4, (4, 48, 96), dtype=jnp.float32)
    tvw = jax.block_until_ready(total_variation(xw, target_block_bytes=16 * 1024))
    assert jnp.allclose(tvw, _tv_reference(xw), rtol=1e-4, atol=1e-2)

    print("KERNEL_OK")
</pallas_src>

<mosaic_0001>
module attributes {stable_mosaic.version = 11 : i64} {
  func.func @_tv_kernel(%arg0: i32, %arg1: i32, %arg2: memref<8x16x16xf32, #tpu.memory_space<vmem>>, %arg3: memref<8x1xf32, #tpu.memory_space<vmem>>, %arg4: memref<8x8x16xf32, #tpu.memory_space<vmem>>, %arg5: memref<8x16xf32, #tpu.memory_space<vmem>>, %arg6: memref<8x16xf32, #tpu.memory_space<vmem>>) attributes {dimension_semantics = [#tpu.dimension_semantics<parallel>, #tpu.dimension_semantics<arbitrary>], iteration_bounds = array<i64: 1, 1>, scalar_prefetch = 0 : i64, scratch_operands = 3 : i64, tpu.core_type = #tpu.core_type<tc>, window_params = [{transform_indices = @transform_0, window_bounds = array<i64: 8, 16, 16>}, {transform_indices = @transform_1, window_bounds = array<i64: 8, 1>}]} {
    %c0 = arith.constant 0 : index
    %c0_0 = arith.constant 0 : index
    %c0_1 = arith.constant 0 : index
    %0 = vector.load %arg2[%c0, %c0_0, %c0_1] : memref<8x16x16xf32, #tpu.memory_space<vmem>>, vector<8x16x16xf32>
    %c1_i32 = arith.constant 1 : i32
    %1 = tpu.dynamic_rotate %0 by %c1_i32 dim 2 : vector<8x16x16xf32>, i32 -> vector<8x16x16xf32>
    %2 = arith.subf %0, %1 : vector<8x16x16xf32>
    %3 = math.absf %2 : vector<8x16x16xf32>
    %c1_i32_2 = arith.constant 1 : i32
    %4 = tpu.dynamic_rotate %0 by %c1_i32_2 dim 1 : vector<8x16x16xf32>, i32 -> vector<8x16x16xf32>
    %5 = arith.subf %0, %4 : vector<8x16x16xf32>
    %6 = math.absf %5 : vector<8x16x16xf32>
    %7 = vector.extract_strided_slice %3 {offsets = [0, 0, 0], sizes = [8, 8, 16], strides = [1, 1, 1]} : vector<8x16x16xf32> to vector<8x8x16xf32>
    %8 = vector.extract_strided_slice %3 {offsets = [0, 8, 0], sizes = [8, 8, 16], strides = [1, 1, 1]} : vector<8x16x16xf32> to vector<8x8x16xf32>
    %9 = arith.addf %7, %8 : vector<8x8x16xf32>
    %10 = vector.extract_strided_slice %6 {offsets = [0, 0, 0], sizes = [8, 8, 16], strides = [1, 1, 1]} : vector<8x16x16xf32> to vector<8x8x16xf32>
    %11 = vector.extract_strided_slice %6 {offsets = [0, 8, 0], sizes = [8, 8, 16], strides = [1, 1, 1]} : vector<8x16x16xf32> to vector<8x8x16xf32>
    %12 = arith.addf %10, %11 : vector<8x8x16xf32>
    %13 = tpu.iota {dimensions = array<i32: 2>} : vector<8x8x16xi32>
    %c1_i32_3 = arith.constant 1 : i32
    %14 = vector.broadcast %c1_i32_3 : i32 to vector<8x8x16xi32>
    %15 = arith.cmpi sge, %13, %14 : vector<8x8x16xi32>
    %cst = arith.constant 0.000000e+00 : f32
    %16 = vector.broadcast %cst : f32 to vector<8x8x16xf32>
    %17 = arith.select %15, %9, %16 : vector<8x8x16xi1>, vector<8x8x16xf32>
    %18 = vector.extract_strided_slice %0 {offsets = [0, 0, 0], sizes = [8, 1, 16], strides = [1, 1, 1]} : vector<8x16x16xf32> to vector<8x1x16xf32>
    %19 = vector.shape_cast %18 : vector<8x1x16xf32> to vector<8x16xf32>
    %20 = vector.extract_strided_slice %0 {offsets = [0, 15, 0], sizes = [8, 1, 16], strides = [1, 1, 1]} : vector<8x16x16xf32> to vector<8x1x16xf32>
    %21 = vector.shape_cast %20 : vector<8x1x16xf32> to vector<8x16xf32>
    %22 = arith.subf %19, %21 : vector<8x16xf32>
    %23 = math.absf %22 : vector<8x16xf32>
    %c0_i32 = arith.constant 0 : i32
    %24 = arith.cmpi sgt, %arg1, %c0_i32 : i32
    %c0_4 = arith.constant 0 : index
    %c0_5 = arith.constant 0 : index
    %25 = vector.load %arg6[%c0_4, %c0_5] : memref<8x16xf32, #tpu.memory_space<vmem>>, vector<8x16xf32>
    %26 = arith.subf %19, %25 : vector<8x16xf32>
    %27 = math.absf %26 : vector<8x16xf32>
    %cst_6 = arith.constant 0.000000e+00 : f32
    %28 = vector.broadcast %cst_6 : f32 to vector<8x16xf32>
    %29 = arith.select %24, %27, %28 : vector<8x16xf32>
    %c0_7 = arith.constant 0 : index
    %c0_8 = arith.constant 0 : index
    %30 = vector.load %arg6[%c0_7, %c0_8] : memref<8x16xf32, #tpu.memory_space<vmem>>, vector<8x16xf32>
    tpu.vector_store %arg6[%c0_7, %c0_8], %21 {strides = array<i32>} : memref<8x16xf32, #tpu.memory_space<vmem>>, vector<8x16xf32>,
    %c0_i32_9 = arith.constant 0 : i32
    %31 = arith.cmpi eq, %arg1, %c0_i32_9 : i32
    %32 = arith.extui %31 : i1 to i32
    %c0_i32_10 = arith.constant 0 : i32
    %33 = arith.cmpi ne, %32, %c0_i32_10 : i32
    scf.if %33 {
      %cst_23 = arith.constant 0.000000e+00 : f32
      %45 = vector.broadcast %cst_23 : f32 to vector<8x8x16xf32>
      %c0_24 = arith.constant 0 : index
      %c0_25 = arith.constant 0 : index
      %c0_26 = arith.constant 0 : index
      %46 = vector.load %arg4[%c0_24, %c0_25, %c0_26] : memref<8x8x16xf32, #tpu.memory_space<vmem>>, vector<8x8x16xf32>
      tpu.vector_store %arg4[%c0_24, %c0_25, %c0_26], %45 {strides = array<i32>} : memref<8x8x16xf32, #tpu.memory_space<vmem>>, vector<8x8x16xf32>,
      %cst_27 = arith.constant 0.000000e+00 : f32
      %47 = vector.broadcast %cst_27 : f32 to vector<8x16xf32>
      %c0_28 = arith.constant 0 : index
      %c0_29 = arith.constant 0 : index
      %48 = vector.load %arg5[%c0_28, %c0_29] : memref<8x16xf32, #tpu.memory_space<vmem>>, vector<8x16xf32>
      tpu.vector_store %arg5[%c0_28, %c0_29], %47 {strides = array<i32>} : memref<8x16xf32, #tpu.memory_space<vmem>>, vector<8x16xf32>,
    } else {
    }
    %c0_11 = arith.constant 0 : index
    %c0_12 = arith.constant 0 : index
    %c0_13 = arith.constant 0 : index
    %34 = vector.load %arg4[%c0_11, %c0_12, %c0_13] : memref<8x8x16xf32, #tpu.memory_space<vmem>>, vector<8x8x16xf32>
    %35 = arith.addf %17, %12 : vector<8x8x16xf32>
    %36 = arith.addf %34, %35 : vector<8x8x16xf32>
    %c0_14 = arith.constant 0 : index
    %c0_15 = arith.constant 0 : index
    %c0_16 = arith.constant 0 : index
    %37 = vector.load %arg4[%c0_14, %c0_15, %c0_16] : memref<8x8x16xf32, #tpu.memory_space<vmem>>, vector<8x8x16xf32>
    tpu.vector_store %arg4[%c0_14, %c0_15, %c0_16], %36 {strides = array<i32>} : memref<8x8x16xf32, #tpu.memory_space<vmem>>, vector<8x8x16xf32>,
    %c0_17 = arith.constant 0 : index
    %c0_18 = arith.constant 0 : index
    %38 = vector.load %arg5[%c0_17, %c0_18] : memref<8x16xf32, #tpu.memory_space<vmem>>, vector<8x16xf32>
    %39 = arith.subf %29, %23 : vector<8x16xf32>
    %40 = arith.addf %38, %39 : vector<8x16xf32>
    %c0_19 = arith.constant 0 : index
    %c0_20 = arith.constant 0 : index
    %41 = vector.load %arg5[%c0_19, %c0_20] : memref<8x16xf32, #tpu.memory_space<vmem>>, vector<8x16xf32>
    tpu.vector_store %arg5[%c0_19, %c0_20], %40 {strides = array<i32>} : memref<8x16xf32, #tpu.memory_space<vmem>>, vector<8x16xf32>,
    %c0_i32_21 = arith.constant 0 : i32
    %42 = arith.cmpi eq, %arg1, %c0_i32_21 : i32
    %43 = arith.extui %42 : i1 to i32
    %c0_i32_22 = arith.constant 0 : i32
    %44 = arith.cmpi ne, %43, %c0_i32_22 : i32
    scf.if %44 {
      %c0_23 = arith.constant 0 : index
      %c0_24 = arith.constant 0 : index
      %c0_25 = arith.constant 0 : index
      %45 = vector.load %arg4[%c0_23, %c0_24, %c0_25] : memref<8x8x16xf32, #tpu.memory_space<vmem>>, vector<8x8x16xf32>
      %cst_26 = arith.constant dense<0.000000e+00> : vector<8x16xf32>
      %46 = vector.multi_reduction <add>, %45, %cst_26 [1] : vector<8x8x16xf32> to vector<8x16xf32>
      %c0_27 = arith.constant 0 : index
      %c0_28 = arith.constant 0 : index
      %47 = vector.load %arg5[%c0_27, %c0_28] : memref<8x16xf32, #tpu.memory_space<vmem>>, vector<8x16xf32>
      %48 = arith.addf %46, %47 : vector<8x16xf32>
      %cst_29 = arith.constant dense<0.000000e+00> : vector<8xf32>
      %49 = vector.multi_reduction <add>, %48, %cst_29 [1] : vector<8x16xf32> to vector<8xf32>
      %50 = vector.shape_cast %49 : vector<8xf32> to vector<8x1xf32>
      %c0_30 = arith.constant 0 : index
      %c0_31 = arith.constant 0 : index
      %51 = vector.load %arg3[%c0_30, %c0_31] : memref<8x1xf32, #tpu.memory_space<vmem>>, vector<8x1xf32>
      tpu.vector_store %arg3[%c0_30, %c0_31], %50 {strides = array<i32>} : memref<8x1xf32, #tpu.memory_space<vmem>>, vector<8x1xf32>,
    } else {
    }
    return
  }
  func.func @transform_0(%arg0: i32, %arg1: i32) -> (i32, i32, i32) {
    %c0_i32 = arith.constant 0 : i32
    %c0_i32_0 = arith.constant 0 : i32
    return %arg0, %arg1, %c0_i32 : i32, i32, i32
  }
  func.func @transform_1(%arg0: i32, %arg1: i32) -> (i32, i32) {
    %c0_i32 = arith.constant 0 : i32
    %c0_i32_0 = arith.constant 0 : i32
    return %arg0, %c0_i32 : i32, i32
  }
}

</mosaic_0001>

<llo_original>
// kernel: tpu_custom_call.1
$region0: #{tpu_custom_call.1}
  #allocation0 [shape = 'u32[]', space=smem, size = 0x4, offset = 0x4, fixed_abs, tag = 'smem constant byte address 0x4 - core index']
  #allocation1 [shape = 'u32[72,128]{1,0:T(1,128)}', space=vmem, size = 0x9000, scoped, tag = 'internal scratch']
  #allocation2 [shape = 'f32[8,8,16]{2,1,0:T(8,128)}', space=vmem, size = 0x8000, scoped, tag = 'scratch operand']
  #allocation3 [shape = 'f32[8,16]{1,0:T(8,128)}', space=vmem, size = 0x1000, scoped, tag = 'scratch operand']
  #allocation4 [shape = 'f32[8,16]{1,0:T(8,128)}', space=vmem, size = 0x1000, scoped, tag = 'scratch operand']
  %s0 = inlined_call_operand.hbm [shape: f32[8,16,16], index: 0, kind: input, shape index: {}]
  %s1 = inlined_call_operand.vmem [shape: f32[8,1], index: 1, kind: output, shape index: {}]
  %s2 = sld [smem:[#allocation0]]
  $region26: #{tpu_custom_call.1} parent=0
    _
  %s4 = ssub.s32 1, %s2
  %s5 = scalar_select 0, %s4, %s2
  $region1: #{tpu_custom_call.1} parent=0
    #allocation5 [shape = 'u8[65536]{0}', space=vmem, size = 0x10000, scoped, tag = 'input window, operand 0, single buffered']
    #allocation6 [shape = 's32[1]{0}', space=sflag, size = 0x4, scoped, tag = 'scoped memory for tpu_custom_call.1']
    %6 = vsyncpa [#allocation6], 0
    // Predicated region
    $region2: #{tpu_custom_call.1} parent=1 // pred_check
      _
    $region3: #{tpu_custom_call.1} parent=1 // pred_check_branch
      %8 = sbr.rel (0) target = $region5
    $region4: #{tpu_custom_call.1} parent=1 // pred_region
      %10 = vsyncadd [#allocation6], 0
      %s11 = sshll.u32 %s0, 4
      %s12 = int_to_ptr.hbm [resolvable:$true] %s11
      %s13 = sshll.u32 [#allocation5], 4
      %s14 = int_to_ptr.vmem [resolvable:$true] %s13
      %19 = dma.hbm_to_vmem [thread:$0]  %s12, 2048, %s14, [#allocation6], 128, 128, 8
    $region5: #{tpu_custom_call.1} parent=1 // pred_fallthru
      _
    // Predicated region
    $region6: #{tpu_custom_call.1} parent=1 // pred_check
      _
    $region7: #{tpu_custom_call.1} parent=1 // pred_check_branch
      %21 = sbr.rel (0) target = $region9
    $region8: #{tpu_custom_call.1} parent=1 // pred_region
      %23 = dma.done [#allocation6], 2048
    $region9: #{tpu_custom_call.1} parent=1 // pred_fallthru
      _
    %v24 = vld [vmem:[#allocation5] sm:$0xff]
    %v25 = vld [vmem:[#allocation5 + $0x8] sm:$0xff]
    %v26 = vld [vmem:[#allocation5 + $0x10] sm:$0xff]
    %v27 = vld [vmem:[#allocation5 + $0x18] sm:$0xff]
    %v28 = vld [vmem:[#allocation5 + $0x20] sm:$0xff]
    %v29 = vld [vmem:[#allocation5 + $0x28] sm:$0xff]
    %v30 = vld [vmem:[#allocation5 + $0x30] sm:$0xff]
    %v31 = vld [vmem:[#allocation5 + $0x38] sm:$0xff]
    %v32 = vld [vmem:[#allocation5 + $0x40] sm:$0xff]
    %v33 = vld [vmem:[#allocation5 + $0x48] sm:$0xff]
    %v34 = vld [vmem:[#allocation5 + $0x50] sm:$0xff]
    %v35 = vld [vmem:[#allocation5 + $0x58] sm:$0xff]
    %v36 = vld [vmem:[#allocation5 + $0x60] sm:$0xff]
    %v37 = vld [vmem:[#allocation5 + $0x68] sm:$0xff]
    %v38 = vld [vmem:[#allocation5 + $0x70] sm:$0xff]
    %v39 = vld [vmem:[#allocation5 + $0x78] sm:$0xff]
    %vm40 = vcmask 1047680
    %41 = vrot.lane.b32.xlu0 %v24, 16
    %v42 = vpop.permute.xlu0 %41
    %v43 = vsel %vm40, %v42, %v24
    %44 = vrot.lane.b32.xlu0 %v25, 16
    %v45 = vpop.permute.xlu0 %44
    %v46 = vsel %vm40, %v45, %v25
    %47 = vrot.lane.b32.xlu0 %v26, 16
    %v48 = vpop.permute.xlu0 %47
    %v49 = vsel %vm40, %v48, %v26
    %50 = vrot.lane.b32.xlu0 %v27, 16
    %v51 = vpop.permute.xlu0 %50
    %v52 = vsel %vm40, %v51, %v27
    %53 = vrot.lane.b32.xlu0 %v28, 16
    %v54 = vpop.permute.xlu0 %53
    %v55 = vsel %vm40, %v54, %v28
    %56 = vrot.lane.b32.xlu0 %v29, 16
    %v57 = vpop.permute.xlu0 %56
    %v58 = vsel %vm40, %v57, %v29
    %59 = vrot.lane.b32.xlu0 %v30, 16
    %v60 = vpop.permute.xlu0 %59
    %v61 = vsel %vm40, %v60, %v30
    %62 = vrot.lane.b32.xlu0 %v31, 16
    %v63 = vpop.permute.xlu0 %62
    %v64 = vsel %vm40, %v63, %v31
    %65 = vrot.lane.b32.xlu0 %v32, 16
    %v66 = vpop.permute.xlu0 %65
    %v67 = vsel %vm40, %v66, %v32
    %68 = vrot.lane.b32.xlu0 %v33, 16
    %v69 = vpop.permute.xlu0 %68
    %v70 = vsel %vm40, %v69, %v33
    %71 = vrot.lane.b32.xlu0 %v34, 16
    %v72 = vpop.permute.xlu0 %71
    %v73 = vsel %vm40, %v72, %v34
    %74 = vrot.lane.b32.xlu0 %v35, 16
    %v75 = vpop.permute.xlu0 %74
    %v76 = vsel %vm40, %v75, %v35
    %77 = vrot.lane.b32.xlu0 %v36, 16
    %v78 = vpop.permute.xlu0 %77
    %v79 = vsel %vm40, %v78, %v36
    %80 = vrot.lane.b32.xlu0 %v37, 16
    %v81 = vpop.permute.xlu0 %80
    %v82 = vsel %vm40, %v81, %v37
    %83 = vrot.lane.b32.xlu0 %v38, 16
    %v84 = vpop.permute.xlu0 %83
    %v85 = vsel %vm40, %v84, %v38
    %86 = vrot.lane.b32.xlu0 %v39, 16
    %v87 = vpop.permute.xlu0 %86
    %v88 = vsel %vm40, %v87, %v39
    %89 = vrot.lane.b32.xlu0 %v43, 16
    %v90 = vpop.permute.xlu0 %89
    %91 = vrot.lane.b32.xlu0 %v46, 16
    %v92 = vpop.permute.xlu0 %91
    %93 = vrot.lane.b32.xlu0 %v49, 16
    %v94 = vpop.permute.xlu0 %93
    %95 = vrot.lane.b32.xlu0 %v52, 16
    %v96 = vpop.permute.xlu0 %95
    %97 = vrot.lane.b32.xlu0 %v55, 16
    %v98 = vpop.permute.xlu0 %97
    %99 = vrot.lane.b32.xlu0 %v58, 16
    %v100 = vpop.permute.xlu0 %99
    %101 = vrot.lane.b32.xlu0 %v61, 16
    %v102 = vpop.permute.xlu0 %101
    %103 = vrot.lane.b32.xlu0 %v64, 16
    %v104 = vpop.permute.xlu0 %103
    %105 = vrot.lane.b32.xlu0 %v67, 16
    %v106 = vpop.permute.xlu0 %105
    %107 = vrot.lane.b32.xlu0 %v70, 16
    %v108 = vpop.permute.xlu0 %107
    %109 = vrot.lane.b32.xlu0 %v73, 16
    %v110 = vpop.permute.xlu0 %109
    %111 = vrot.lane.b32.xlu0 %v76, 16
    %v112 = vpop.permute.xlu0 %111
    %113 = vrot.lane.b32.xlu0 %v79, 16
    %v114 = vpop.permute.xlu0 %113
    %115 = vrot.lane.b32.xlu0 %v82, 16
    %v116 = vpop.permute.xlu0 %115
    %117 = vrot.lane.b32.xlu0 %v85, 16
    %v118 = vpop.permute.xlu0 %117
    %119 = vrot.lane.b32.xlu0 %v88, 16
    %v120 = vpop.permute.xlu0 %119
    %v121 = vsel %vm40, %v90, %v24
    %v122 = vsel %vm40, %v92, %v25
    %v123 = vsel %vm40, %v94, %v26
    %v124 = vsel %vm40, %v96, %v27
    %v125 = vsel %vm40, %v98, %v28
    %v126 = vsel %vm40, %v100, %v29
    %v127 = vsel %vm40, %v102, %v30
    %v128 = vsel %vm40, %v104, %v31
    %v129 = vsel %vm40, %v106, %v32
    %v130 = vsel %vm40, %v108, %v33
    %v131 = vsel %vm40, %v110, %v34
    %v132 = vsel %vm40, %v112, %v35
    %v133 = vsel %vm40, %v114, %v36
    %v134 = vsel %vm40, %v116, %v37
    %v135 = vsel %vm40, %v118, %v38
    %v136 = vsel %vm40, %v120, %v39
    %153 = vrot.lane.b32.xlu0 %v121, 113
    %v154 = vpop.permute.xlu0 %153
    %155 = vrot.lane.b32.xlu0 %v122, 113
    %v156 = vpop.permute.xlu0 %155
    %157 = vrot.lane.b32.xlu0 %v123, 113
    %v158 = vpop.permute.xlu0 %157
    %159 = vrot.lane.b32.xlu0 %v124, 113
    %v160 = vpop.permute.xlu0 %159
    %161 = vrot.lane.b32.xlu0 %v125, 113
    %v162 = vpop.permute.xlu0 %161
    %163 = vrot.lane.b32.xlu0 %v126, 113
    %v164 = vpop.permute.xlu0 %163
    %165 = vrot.lane.b32.xlu0 %v127, 113
    %v166 = vpop.permute.xlu0 %165
    %167 = vrot.lane.b32.xlu0 %v128, 113
    %v168 = vpop.permute.xlu0 %167
    %169 = vrot.lane.b32.xlu0 %v129, 113
    %v170 = vpop.permute.xlu0 %169
    %171 = vrot.lane.b32.xlu0 %v130, 113
    %v172 = vpop.permute.xlu0 %171
    %173 = vrot.lane.b32.xlu0 %v131, 113
    %v174 = vpop.permute.xlu0 %173
    %175 = vrot.lane.b32.xlu0 %v132, 113
    %v176 = vpop.permute.xlu0 %175
    %177 = vrot.lane.b32.xlu0 %v133, 113
    %v178 = vpop.permute.xlu0 %177
    %179 = vrot.lane.b32.xlu0 %v134, 113
    %v180 = vpop.permute.xlu0 %179
    %181 = vrot.lane.b32.xlu0 %v135, 113
    %v182 = vpop.permute.xlu0 %181
    %183 = vrot.lane.b32.xlu0 %v136, 113
    %v184 = vpop.permute.xlu0 %183
    %v201 = vsub.f32 %v24, %v154
    %v202 = vsub.f32 %v25, %v156
    %v203 = vsub.f32 %v26, %v158
    %v204 = vsub.f32 %v27, %v160
    %v205 = vsub.f32 %v28, %v162
    %v206 = vsub.f32 %v29, %v164
    %v207 = vsub.f32 %v30, %v166
    %v208 = vsub.f32 %v31, %v168
    %v209 = vsub.f32 %v32, %v170
    %v210 = vsub.f32 %v33, %v172
    %v211 = vsub.f32 %v34, %v174
    %v212 = vsub.f32 %v35, %v176
    %v213 = vsub.f32 %v36, %v178
    %v214 = vsub.f32 %v37, %v180
    %v215 = vsub.f32 %v38, %v182
    %v216 = vsub.f32 %v39, %v184
    %v217 = vand.u32 2147483647, %v201
    %v218 = vand.u32 2147483647, %v202
    %v219 = vand.u32 2147483647, %v203
    %v220 = vand.u32 2147483647, %v204
    %v221 = vand.u32 2147483647, %v205
    %v222 = vand.u32 2147483647, %v206
    %v223 = vand.u32 2147483647, %v207
    %v224 = vand.u32 2147483647, %v208
    %v225 = vand.u32 2147483647, %v209
    %v226 = vand.u32 2147483647, %v210
    %v227 = vand.u32 2147483647, %v211
    %v228 = vand.u32 2147483647, %v212
    %v229 = vand.u32 2147483647, %v213
    %v230 = vand.u32 2147483647, %v214
    %v231 = vand.u32 2147483647, %v215
    %v232 = vand.u32 2147483647, %v216
    %v233 = vrot.slane %v24, 7
    %v234 = vrot.slane %v26, 7
    %v235 = vrot.slane %v28, 7
    %v236 = vrot.slane %v30, 7
    %v237 = vrot.slane %v32, 7
    %v238 = vrot.slane %v34, 7
    %v239 = vrot.slane %v36, 7
    %v240 = vrot.slane %v38, 7
    %v241 = vrot.slane %v25, 7
    %v242 = vrot.slane %v27, 7
    %v243 = vrot.slane %v29, 7
    %v244 = vrot.slane %v31, 7
    %v245 = vrot.slane %v33, 7
    %v246 = vrot.slane %v35, 7
    %v247 = vrot.slane %v37, 7
    %v248 = vrot.slane %v39, 7
    %v249 = vlaneseq
    %v250 = vshrl.u32 %v249, 7
    %vm251 = vcmp.lt.s32.totalorder %v250, 1
    %v252 = vsel %vm251, %v233, %v241
    %v253 = vsel %vm251, %v234, %v242
    %v254 = vsel %vm251, %v235, %v243
    %v255 = vsel %vm251, %v236, %v244
    %v256 = vsel %vm251, %v237, %v245
    %v257 = vsel %vm251, %v238, %v246
    %v258 = vsel %vm251, %v239, %v247
    %v259 = vsel %vm251, %v240, %v248
    %v260 = vsel %vm251, %v241, %v233
    %v261 = vsel %vm251, %v242, %v234
    %v262 = vsel %vm251, %v243, %v235
    %v263 = vsel %vm251, %v244, %v236
    %v264 = vsel %vm251, %v245, %v237
    %v265 = vsel %vm251, %v246, %v238
    %v266 = vsel %vm251, %v247, %v239
    %v267 = vsel %vm251, %v248, %v240
    %v268 = vsub.f32 %v24, %v260
    %v269 = vsub.f32 %v25, %v252
    %v270 = vsub.f32 %v26, %v261
    %v271 = vsub.f32 %v27, %v253
    %v272 = vsub.f32 %v28, %v262
    %v273 = vsub.f32 %v29, %v254
    %v274 = vsub.f32 %v30, %v263
    %v275 = vsub.f32 %v31, %v255
    %v276 = vsub.f32 %v32, %v264
    %v277 = vsub.f32 %v33, %v256
    %v278 = vsub.f32 %v34, %v265
    %v279 = vsub.f32 %v35, %v257
    %v280 = vsub.f32 %v36, %v266
    %v281 = vsub.f32 %v37, %v258
    %v282 = vsub.f32 %v38, %v267
    %v283 = vsub.f32 %v39, %v259
    %v284 = vand.u32 2147483647, %v268
    %v285 = vand.u32 2147483647, %v269
    %v286 = vand.u32 2147483647, %v270
    %v287 = vand.u32 2147483647, %v271
    %v288 = vand.u32 2147483647, %v272
    %v289 = vand.u32 2147483647, %v273
    %v290 = vand.u32 2147483647, %v274
    %v291 = vand.u32 2147483647, %v275
    %v292 = vand.u32 2147483647, %v276
    %v293 = vand.u32 2147483647, %v277
    %v294 = vand.u32 2147483647, %v278
    %v295 = vand.u32 2147483647, %v279
    %v296 = vand.u32 2147483647, %v280
    %v297 = vand.u32 2147483647, %v281
    %v298 = vand.u32 2147483647, %v282
    %v299 = vand.u32 2147483647, %v283
    %v300 = vadd.f32 %v217, %v218
    %v301 = vadd.f32 %v219, %v220
    %v302 = vadd.f32 %v221, %v222
    %v303 = vadd.f32 %v223, %v224
    %v304 = vadd.f32 %v225, %v226
    %v305 = vadd.f32 %v227, %v228
    %v306 = vadd.f32 %v229, %v230
    %v307 = vadd.f32 %v231, %v232
    %v308 = vadd.f32 %v284, %v285
    %v309 = vadd.f32 %v286, %v287
    %v310 = vadd.f32 %v288, %v289
    %v311 = vadd.f32 %v290, %v291
    %v312 = vadd.f32 %v292, %v293
    %v313 = vadd.f32 %v294, %v295
    %v314 = vadd.f32 %v296, %v297
    %v315 = vadd.f32 %v298, %v299
    %v316 = vlaneseq
    %v317 = vand.u32 %v316, 127
    %vm318 = vcmp.ge.s32.totalorder %v317, 1
    %v319 = vsel %vm318, %v300, 0.0
    %v320 = vsel %vm318, %v301, 0.0
    %v321 = vsel %vm318, %v302, 0.0
    %v322 = vsel %vm318, %v303, 0.0
    %v323 = vsel %vm318, %v304, 0.0
    %v324 = vsel %vm318, %v305, 0.0
    %v325 = vsel %vm318, %v306, 0.0
    %v326 = vsel %vm318, %v307, 0.0
    %v335 = vrot.slane %v25, 7
    %v336 = vrot.slane %v27, 7
    %v337 = vrot.slane %v29, 7
    %v338 = vrot.slane %v31, 7
    %v339 = vrot.slane %v33, 7
    %v340 = vrot.slane %v35, 7
    %v341 = vrot.slane %v37, 7
    %v342 = vrot.slane %v39, 7
    %v351 = vsub.f32 %v24, %v335
    %v352 = vsub.f32 %v26, %v336
    %v353 = vsub.f32 %v28, %v337
    %v354 = vsub.f32 %v30, %v338
    %v355 = vsub.f32 %v32, %v339
    %v356 = vsub.f32 %v34, %v340
    %v357 = vsub.f32 %v36, %v341
    %v358 = vsub.f32 %v38, %v342
    %v359 = vand.u32 2147483647, %v351
    %v360 = vand.u32 2147483647, %v352
    %v361 = vand.u32 2147483647, %v353
    %v362 = vand.u32 2147483647, %v354
    %v363 = vand.u32 2147483647, %v355
    %v364 = vand.u32 2147483647, %v356
    %v365 = vand.u32 2147483647, %v357
    %v366 = vand.u32 2147483647, %v358
    %p367 = scmp.gt.s32.totalorder 0, 0
    %v368 = vld [vmem:[#allocation4] sm:$0xff]
    %v370 = vrot.slane %v368, 1
    %v371 = vrot.slane %v368, 2
    %v372 = vrot.slane %v368, 3
    %v373 = vrot.slane %v368, 4
    %v374 = vrot.slane %v368, 5
    %v375 = vrot.slane %v368, 6
    %v376 = vrot.slane %v368, 7
    %v385 = vsub.f32 %v24, %v368
    %v386 = vsub.f32 %v26, %v370
    %v387 = vsub.f32 %v28, %v371
    %v388 = vsub.f32 %v30, %v372
    %v389 = vsub.f32 %v32, %v373
    %v390 = vsub.f32 %v34, %v374
    %v391 = vsub.f32 %v36, %v375
    %v392 = vsub.f32 %v38, %v376
    %v393 = vand.u32 2147483647, %v385
    %v394 = vand.u32 2147483647, %v386
    %v395 = vand.u32 2147483647, %v387
    %v396 = vand.u32 2147483647, %v388
    %v397 = vand.u32 2147483647, %v389
    %v398 = vand.u32 2147483647, %v390
    %v399 = vand.u32 2147483647, %v391
    %v400 = vand.u32 2147483647, %v392
    %s401 = scalar_select %p367, 1, 0
    %v402 = vstv %s401
    %vm403 = vcmp.eq.s32.totalorder %v402, 1
    %v404 = vsel %vm403, %v393, 0.0
    %v405 = vsel %vm403, %v394, 0.0
    %v406 = vsel %vm403, %v395, 0.0
    %v407 = vsel %vm403, %v396, 0.0
    %v408 = vsel %vm403, %v397, 0.0
    %v409 = vsel %vm403, %v398, 0.0
    %v410 = vsel %vm403, %v399, 0.0
    %v411 = vsel %vm403, %v400, 0.0
    %v412 = vrot.slane %v29, 6
    %vm413 = vcmask 1041409
    %v414 = vsel %vm413, %v412, %v336
    %v415 = vrot.slane %v31, 5
    %vm416 = vcmask 1042434
    %v417 = vsel %vm416, %v415, %v414
    %v418 = vrot.slane %v33, 4
    %vm419 = vcmask 1043459
    %v420 = vsel %vm419, %v418, %v417
    %v421 = vrot.slane %v35, 3
    %vm422 = vcmask 1044484
    %v423 = vsel %vm422, %v421, %v420
    %v424 = vrot.slane %v37, 2
    %vm425 = vcmask 1045509
    %v426 = vsel %vm425, %v424, %v423
    %v427 = vrot.slane %v39, 1
    %vm428 = vcmask 1046534
    %v429 = vsel %vm428, %v427, %v426
    %vm432 = vcmask 130055
    %433 = vst.msk [vmem:[#allocation4 - $0x7] sm:$0x80] %vm432, %v25
    %vm434 = vcmask 129024
    %435 = vst.msk [vmem:[#allocation4 + $0x1] sm:$0x7f] %vm434, %v429
    %p436 = scmp.eq.s32.totalorder 0, 0
    // Predicated region
    $region10: #{tpu_custom_call.1} parent=1 // pred_check
      %p437 = pneg %p436
    $region11: #{tpu_custom_call.1} parent=1 // pred_check_branch
      %439 = sbr.rel (%p437) target = $region13
    $region12: #{tpu_custom_call.1} parent=1 // pred_region
      %vm440 = vcmask 130048
      %441 = vst.msk [vmem:[#allocation2] sm:$0xff] %vm440, 0.0
      %442 = vst.msk [vmem:[#allocation2 + $0x8] sm:$0xff] %vm440, 0.0
      %443 = vst.msk [vmem:[#allocation2 + $0x10] sm:$0xff] %vm440, 0.0
      %444 = vst.msk [vmem:[#allocation2 + $0x18] sm:$0xff] %vm440, 0.0
      %445 = vst.msk [vmem:[#allocation2 + $0x20] sm:$0xff] %vm440, 0.0
      %446 = vst.msk [vmem:[#allocation2 + $0x28] sm:$0xff] %vm440, 0.0
      %447 = vst.msk [vmem:[#allocation2 + $0x30] sm:$0xff] %vm440, 0.0
      %448 = vst.msk [vmem:[#allocation2 + $0x38] sm:$0xff] %vm440, 0.0
      %449 = vst.msk [vmem:[#allocation3] sm:$0xff] %vm440, 0.0
    $region13: #{tpu_custom_call.1} parent=1 // pred_fallthru
      _
    %v450 = vld [vmem:[#allocation2] sm:$0xff]
    %v451 = vld [vmem:[#allocation2 + $0x8] sm:$0xff]
    %v452 = vld [vmem:[#allocation2 + $0x10] sm:$0xff]
    %v453 = vld [vmem:[#allocation2 + $0x18] sm:$0xff]
    %v454 = vld [vmem:[#allocation2 + $0x20] sm:$0xff]
    %v455 = vld [vmem:[#allocation2 + $0x28] sm:$0xff]
    %v456 = vld [vmem:[#allocation2 + $0x30] sm:$0xff]
    %v457 = vld [vmem:[#allocation2 + $0x38] sm:$0xff]
    %v458 = vadd.f32 %v319, %v308
    %v459 = vadd.f32 %v320, %v309
    %v460 = vadd.f32 %v321, %v310
    %v461 = vadd.f32 %v322, %v311
    %v462 = vadd.f32 %v323, %v312
    %v463 = vadd.f32 %v324, %v313
    %v464 = vadd.f32 %v325, %v314
    %v465 = vadd.f32 %v326, %v315
    %v466 = vadd.f32 %v450, %v458
    %v467 = vadd.f32 %v451, %v459
    %v468 = vadd.f32 %v452, %v460
    %v469 = vadd.f32 %v453, %v461
    %v470 = vadd.f32 %v454, %v462
    %v471 = vadd.f32 %v455, %v463
    %v472 = vadd.f32 %v456, %v464
    %v473 = vadd.f32 %v457, %v465
    %vm474 = vcmask 130048
    %475 = vst.msk [vmem:[#allocation2] sm:$0xff] %vm474, %v466
    %476 = vst.msk [vmem:[#allocation2 + $0x8] sm:$0xff] %vm474, %v467
    %477 = vst.msk [vmem:[#allocation2 + $0x10] sm:$0xff] %vm474, %v468
    %478 = vst.msk [vmem:[#allocation2 + $0x18] sm:$0xff] %vm474, %v469
    %479 = vst.msk [vmem:[#allocation2 + $0x20] sm:$0xff] %vm474, %v470
    %480 = vst.msk [vmem:[#allocation2 + $0x28] sm:$0xff] %vm474, %v471
    %481 = vst.msk [vmem:[#allocation2 + $0x30] sm:$0xff] %vm474, %v472
    %482 = vst.msk [vmem:[#allocation2 + $0x38] sm:$0xff] %vm474, %v473
    %v483 = vld [vmem:[#allocation3] sm:$0xff]
    %v484 = vsub.f32 %v404, %v359
    %v485 = vsub.f32 %v405, %v360
    %v486 = vsub.f32 %v406, %v361
    %v487 = vsub.f32 %v407, %v362
    %v488 = vsub.f32 %v408, %v363
    %v489 = vsub.f32 %v409, %v364
    %v490 = vsub.f32 %v410, %v365
    %v491 = vsub.f32 %v411, %v366
    %v500 = vrot.slane %v485, 7
    %v501 = vsel %vm413, %v500, %v484
    %v502 = vrot.slane %v486, 6
    %v503 = vsel %vm416, %v502, %v501
    %v504 = vrot.slane %v487, 5
    %v505 = vsel %vm419, %v504, %v503
    %v506 = vrot.slane %v488, 4
    %v507 = vsel %vm422, %v506, %v505
    %v508 = vrot.slane %v489, 3
    %v509 = vsel %vm425, %v508, %v507
    %v510 = vrot.slane %v490, 2
    %v511 = vsel %vm428, %v510, %v509
    %v512 = vrot.slane %v491, 1
    %vm513 = vcmask 1047559
    %v514 = vsel %vm513, %v512, %v511
    %v516 = vadd.f32 %v483, %v514
    %517 = vst.msk [vmem:[#allocation3] sm:$0xff] %vm474, %v516
    // Predicated region
    $region14: #{tpu_custom_call.1} parent=1 // pred_check
      %p518 = pneg %p436
    $region15: #{tpu_custom_call.1} parent=1 // pred_check_branch
      %520 = sbr.rel (%p518) target = $region17
    $region16: #{tpu_custom_call.1} parent=1 // pred_region
      %v521 = vld [vmem:[#allocation2] sm:$0xff]
      %v522 = vld [vmem:[#allocation2 + $0x8] sm:$0xff]
      %v523 = vld [vmem:[#allocation2 + $0x10] sm:$0xff]
      %v524 = vld [vmem:[#allocation2 + $0x18] sm:$0xff]
      %v525 = vld [vmem:[#allocation2 + $0x20] sm:$0xff]
      %v526 = vld [vmem:[#allocation2 + $0x28] sm:$0xff]
      %v527 = vld [vmem:[#allocation2 + $0x30] sm:$0xff]
      %v528 = vld [vmem:[#allocation2 + $0x38] sm:$0xff]
      %v529 = vsel %vm474, %v521, 0.0
      %v530 = vrot.slane %v529, 4
      %v531 = vadd.f32 %v529, %v530
      %v532 = vrot.slane %v531, 2
      %v533 = vadd.f32 %v531, %v532
      %v534 = vrot.slane %v533, 1
      %v535 = vadd.f32 %v533, %v534
      %v536 = vsel %vm474, %v522, 0.0
      %v537 = vrot.slane %v536, 4
      %v538 = vadd.f32 %v536, %v537
      %v539 = vrot.slane %v538, 2
      %v540 = vadd.f32 %v538, %v539
      %v541 = vrot.slane %v540, 1
      %v542 = vadd.f32 %v540, %v541
      %v543 = vsel %vm474, %v523, 0.0
      %v544 = vrot.slane %v543, 4
      %v545 = vadd.f32 %v543, %v544
      %v546 = vrot.slane %v545, 2
      %v547 = vadd.f32 %v545, %v546
      %v548 = vrot.slane %v547, 1
      %v549 = vadd.f32 %v547, %v548
      %v550 = vsel %vm474, %v524, 0.0
      %v551 = vrot.slane %v550, 4
      %v552 = vadd.f32 %v550, %v551
      %v553 = vrot.slane %v552, 2
      %v554 = vadd.f32 %v552, %v553
      %v555 = vrot.slane %v554, 1
      %v556 = vadd.f32 %v554, %v555
      %v557 = vsel %vm474, %v525, 0.0
      %v558 = vrot.slane %v557, 4
      %v559 = vadd.f32 %v557, %v558
      %v560 = vrot.slane %v559, 2
      %v561 = vadd.f32 %v559, %v560
      %v562 = vrot.slane %v561, 1
      %v563 = vadd.f32 %v561, %v562
      %v564 = vsel %vm474, %v526, 0.0
      %v565 = vrot.slane %v564, 4
      %v566 = vadd.f32 %v564, %v565
      %v567 = vrot.slane %v566, 2
      %v568 = vadd.f32 %v566, %v567
      %v569 = vrot.slane %v568, 1
      %v570 = vadd.f32 %v568, %v569
      %v571 = vsel %vm474, %v527, 0.0
      %v572 = vrot.slane %v571, 4
      %v573 = vadd.f32 %v571, %v572
      %v574 = vrot.slane %v573, 2
      %v575 = vadd.f32 %v573, %v574
      %v576 = vrot.slane %v575, 1
      %v577 = vadd.f32 %v575, %v576
      %v578 = vsel %vm474, %v528, 0.0
      %v579 = vrot.slane %v578, 4
      %v580 = vadd.f32 %v578, %v579
      %v581 = vrot.slane %v580, 2
      %v582 = vadd.f32 %v580, %v581
      %v583 = vrot.slane %v582, 1
      %v584 = vadd.f32 %v582, %v583
      %v585 = vld [vmem:[#allocation3] sm:$0xff]
      %v587 = vrot.slane %v585, 1
      %v588 = vrot.slane %v585, 2
      %v589 = vrot.slane %v585, 3
      %v590 = vrot.slane %v585, 4
      %v591 = vrot.slane %v585, 5
      %v592 = vrot.slane %v585, 6
      %v593 = vrot.slane %v585, 7
      %v602 = vadd.f32 %v535, %v585
      %v603 = vadd.f32 %v542, %v587
      %v604 = vadd.f32 %v549, %v588
      %v605 = vadd.f32 %v556, %v589
      %v606 = vadd.f32 %v563, %v590
      %v607 = vadd.f32 %v570, %v591
      %v608 = vadd.f32 %v577, %v592
      %v609 = vadd.f32 %v584, %v593
      %v618 = vrot.slane %v603, 7
      %v619 = vsel %vm413, %v618, %v602
      %v620 = vrot.slane %v604, 6
      %v621 = vsel %vm416, %v620, %v619
      %v622 = vrot.slane %v605, 5
      %v623 = vsel %vm419, %v622, %v621
      %v624 = vrot.slane %v606, 4
      %v625 = vsel %vm422, %v624, %v623
      %v626 = vrot.slane %v607, 3
      %v627 = vsel %vm425, %v626, %v625
      %v628 = vrot.slane %v608, 2
      %v629 = vsel %vm428, %v628, %v627
      %v630 = vrot.slane %v609, 1
      %v631 = vsel %vm513, %v630, %v629
      %v633 = vsel %vm474, %v631, 0.0
      %634 = vadd.xlane.f32.xlu0 %v633
      %v635 = vpop.xlane.xlu0 %634
      %vm636 = vcmask 7168
      %637 = vst.msk [vmem:[%s1] sm:$0xff] %vm636, %v635
    $region17: #{tpu_custom_call.1} parent=1 // pred_fallthru
      _
    // Predicated region
    $region18: #{tpu_custom_call.1} parent=1 // pred_check
      _
    $region19: #{tpu_custom_call.1} parent=1 // pred_check_branch
      %639 = sbr.rel (0) target = $region21
    $region20: #{tpu_custom_call.1} parent=1 // pred_region
      _
    $region21: #{tpu_custom_call.1} parent=1 // pred_fallthru
      _
    // Predicated region
    $region22: #{tpu_custom_call.1} parent=1 // pred_check
      _
    $region23: #{tpu_custom_call.1} parent=1 // pred_check_branch
      %641 = sbr.rel (0) target = $region25
    $region24: #{tpu_custom_call.1} parent=1 // pred_region
      _
    $region25: #{tpu_custom_call.1} parent=1 // pred_fallthru
      _
    %642 = vsyncpa [#allocation6], 1

</llo_original>
